<compile_context>
chip_gen: v7x
topology: tpu7x:2x2x1
jax: 0.10.0
libtpu: 0.0.40
codegen_flags: <defaults>
</compile_context>

<pallas_src>
import functools

import jax
import jax.numpy as jnp
from jax.experimental import pallas as pl
from jax.experimental.pallas import tpu as pltpu


# ----------------------------------------------------------------------------
# Tiled linear kernel:  out = x @ w_t + b   (bf16 MXU operands, f32 accumulate)
# w_t is pre-cast to bf16 by the caller (it is re-streamed for every M tile);
# the in-kernel astype is a no-op for bf16 inputs.
# ----------------------------------------------------------------------------
def _linear_kernel(x_ref, w_ref, b_ref, o_ref, acc_ref):
    @pl.when(pl.program_id(2) == 0)
    def _():
        acc_ref[...] = jnp.zeros_like(acc_ref)

    acc_ref[...] += jnp.dot(
        x_ref[...].astype(jnp.bfloat16),
        w_ref[...].astype(jnp.bfloat16),
        preferred_element_type=jnp.float32)

    @pl.when(pl.program_id(2) == pl.num_programs(2) - 1)
    def _():
        o_ref[...] = (acc_ref[...] + b_ref[...]).astype(o_ref.dtype)


def linear_pallas(x, w_t, b, *, out_dtype=None, tm=256, tn=256, tk=512):
    """x: (M, K), w_t: (K, N) bf16, b: (N,) -> x @ w_t + b, shape (M, N)."""
    M, K = x.shape
    N = w_t.shape[1]
    out_dtype = x.dtype if out_dtype is None else out_dtype
    tm, tn, tk = min(tm, M), min(tn, N), min(tk, K)
    assert M % tm == 0 and N % tn == 0 and K % tk == 0
    b2 = b.reshape(1, N).astype(jnp.float32)
    return pl.pallas_call(
        _linear_kernel,
        out_shape=jax.ShapeDtypeStruct((M, N), out_dtype),
        grid=(M // tm, N // tn, K // tk),
        in_specs=[
            pl.BlockSpec((tm, tk), lambda i, j, k: (i, k)),
            pl.BlockSpec((tk, tn), lambda i, j, k: (k, j)),
            pl.BlockSpec((1, tn), lambda i, j, k: (0, j)),
        ],
        out_specs=pl.BlockSpec((tm, tn), lambda i, j, k: (i, j)),
        scratch_shapes=[pltpu.VMEM((tm, tn), jnp.float32)],
        compiler_params=pltpu.CompilerParams(
            dimension_semantics=("parallel", "parallel", "arbitrary"),
            vmem_limit_bytes=64 * 1024 * 1024),
    )(x, w_t, b2)


# ----------------------------------------------------------------------------
# Attention kernel: one (batch, q-row-tile) per grid step, static loop over
# heads.  qkv block (index map ignores the q-tile axis) stays resident in VMEM
# across all q-tiles of a batch element.
# ----------------------------------------------------------------------------
def _attn_kernel(qkv_ref, rh_ref, rw_ref, ee_ref, o_ref,
                 *, num_heads, H, W, h_tile):
    S = H * W
    rows = h_tile * W
    dim = o_ref.shape[-1]
    hd = dim // num_heads

    row0 = pl.multiple_of(pl.program_id(1) * rows, 8)

    ee = ee_ref[...]                                   # (S, H+W)   bf16, 0/1
    rh = rh_ref[...]                                   # (h_tile, H, hd) bf16
    rw = rw_ref[...]                                   # (W, W, hd)      bf16

    # Static head loop: q/k/v are column slices of the fused qkv block (no
    # head-split transposes); per-head output is a column-slice store.
    # TODO(synk): at production shapes use a head grid axis / fori_loop to
    #             bound live ranges instead of a straight-line unrolled trace.
    for h in range(num_heads):
        q_h = qkv_ref[0, pl.ds(row0, rows), pl.ds(h * hd, hd)]          # (rows, hd)
        k_h = qkv_ref[0, :, pl.ds(dim + h * hd, hd)]                    # (S, hd), pre-scaled
        v_h = qkv_ref[0, :, pl.ds(2 * dim + h * hd, hd)]                # (S, hd)

        # decomposed rel-pos, unscaled q (scale is folded into k only):
        #   rel_h[(hq,wq), kh] = sum_c q[hq,wq,c] * Rh[hq,kh,c]   (batch over hq)
        #   rel_w[(hq,wq), kw] = sum_c q[hq,wq,c] * Rw[wq,kw,c]   (batch over wq)
        q3 = q_h.reshape(h_tile, W, hd)
        rel_h = jax.lax.dot_general(
            q3, rh, (((2,), (2,)), ((0,), (0,))),
            preferred_element_type=jnp.float32)                         # (h_tile, W, H)
        rel_h = rel_h.reshape(rows, H).astype(jnp.bfloat16)
        rel_w = jax.lax.dot_general(
            q3, rw, (((2,), (2,)), ((1,), (0,))),
            preferred_element_type=jnp.float32)                         # (W, h_tile, W)
        rel_w = jnp.transpose(rel_w.astype(jnp.bfloat16),
                              (1, 0, 2)).reshape(rows, W)

        # Fused scores: single MXU matmul with contraction depth hd + H + W
        # (scaled q@k^T plus both rel-pos expansions; no (rows,S) f32 adds).
        lhs = jnp.concatenate([q_h, rel_h, rel_w], axis=-1)             # (rows, hd+H+W)
        rhs = jnp.concatenate([k_h, ee], axis=-1)                       # (S,    hd+H+W)
        attn = jax.lax.dot_general(
            lhs, rhs, (((1,), (1,)), ((), ())),
            preferred_element_type=jnp.float32)                         # (rows, S) f32

        # softmax over keys; normalize AFTER p@v (only a (rows, hd) rescale).
        m = jnp.max(attn, axis=-1, keepdims=True)
        e = jnp.exp(attn - m)
        denom = jnp.sum(e, axis=-1, keepdims=True)                      # (rows, 1)
        out_h = jnp.dot(e.astype(jnp.bfloat16), v_h,
                        preferred_element_type=jnp.float32)             # (rows, hd)
        out_h = out_h * pl.reciprocal(denom, approx=True)

        o_ref[0, :, pl.ds(h * hd, hd)] = out_h.astype(o_ref.dtype)


def attention_pallas(qkv, Rh, Rw, ee, num_heads, H, W, h_tile):
    B, S, three_dim = qkv.shape
    dim = three_dim // 3
    hd = dim // num_heads
    rows = h_tile * W
    n_qt = H // h_tile
    kernel = functools.partial(_attn_kernel, num_heads=num_heads,
                               H=H, W=W, h_tile=h_tile)
    return pl.pallas_call(
        kernel,
        out_shape=jax.ShapeDtypeStruct((B, S, dim), jnp.bfloat16),
        grid=(B, n_qt),
        in_specs=[
            # fused qkv block: resident across the q-tile axis (index ignores t)
            pl.BlockSpec((1, S, three_dim), lambda b, t: (b, 0, 0)),
            # Rh rows for this q-tile only
            pl.BlockSpec((h_tile, H, hd), lambda b, t: (t, 0, 0)),
            pl.BlockSpec((W, W, hd), lambda b, t: (0, 0, 0)),
            # [eh^T | ew^T] 0/1 expansion (key side), shared across all steps
            pl.BlockSpec((S, H + W), lambda b, t: (0, 0)),
        ],
        out_specs=pl.BlockSpec((1, rows, dim), lambda b, t: (b, t, 0)),
        compiler_params=pltpu.CompilerParams(
            dimension_semantics=("parallel", "parallel"),
            vmem_limit_bytes=64 * 1024 * 1024),
    )(qkv, Rh, Rw, ee)


# ----------------------------------------------------------------------------
# Glue (plain JAX): rel-pos table extraction, parameter prep
# ----------------------------------------------------------------------------
def get_rel_pos_jax(q_size, k_size, rel_pos):
    max_rel_dist = int(2 * max(q_size, k_size) - 1)
    assert rel_pos.shape[0] == max_rel_dist
    q_coords = jnp.arange(q_size)[:, None] * max(k_size / q_size, 1.0)
    k_coords = jnp.arange(k_size)[None, :] * max(q_size / k_size, 1.0)
    rel_coords = (q_coords - k_coords +
                  (k_size - 1) * max(q_size / k_size, 1.0)).astype(jnp.int32)
    return rel_pos[rel_coords]                      # (q_size, k_size, head_dim)


def _pick_h_tile(H, W, max_q_rows):
    """Largest divisor of H whose q-row block fits max_q_rows (and tiles VMEM)."""
    h_tile = H                                       # rows == S is always legal
    for cand in range(1, H + 1):
        rows = cand * W
        if H % cand == 0 and rows <= max_q_rows and (rows % 16 == 0 or rows == H * W):
            h_tile = cand
    return h_tile


def attention_forward(x, params, num_heads, max_q_rows=256):
    B, H, W, dim = x.shape
    head_dim = dim // num_heads
    scale = head_dim ** (-0.5)
    S = H * W

    # fold the softmax scale into the K-columns of the qkv projection, and
    # pre-cast the (re-streamed) weights to bf16 at prep time.
    col_scale = jnp.concatenate([jnp.ones((dim,), jnp.float32),
                                 jnp.full((dim,), scale, jnp.float32),
                                 jnp.ones((dim,), jnp.float32)])
    w_qkv_t = (params["w_qkv"].T.astype(jnp.float32)
               * col_scale[None, :]).astype(jnp.bfloat16)
    b_qkv = params["b_qkv"] * col_scale
    w_proj_t = params["w_proj"].T.astype(jnp.bfloat16)

    # qkv projection; bf16 intermediate halves the HBM roundtrip into attention
    qkv = linear_pallas(x.reshape(B * S, dim), w_qkv_t, b_qkv,
                        out_dtype=jnp.bfloat16)
    qkv = qkv.reshape(B, S, 3 * dim)                 # copy-free

    # un-gathered rel-pos tables + transposed 0/1 expansion [eh^T | ew^T]
    Rh = get_rel_pos_jax(H, H, params["rel_pos_h"]).astype(jnp.bfloat16)  # (H,H,C)
    Rw = get_rel_pos_jax(W, W, params["rel_pos_w"]).astype(jnp.bfloat16)  # (W,W,C)
    kj = jnp.arange(S)
    ehT = (kj[:, None] // W == jnp.arange(H)[None, :]).astype(jnp.bfloat16)  # (S,H)
    ewT = (kj[:, None] % W == jnp.arange(W)[None, :]).astype(jnp.bfloat16)   # (S,W)
    ee = jnp.concatenate([ehT, ewT], axis=-1)                                # (S,H+W)

    h_tile = _pick_h_tile(H, W, max_q_rows)
    out = attention_pallas(qkv, Rh, Rw, ee, num_heads, H, W, h_tile)  # (B,S,dim) bf16

    # output projection; reshape of the bf16 attention output is copy-free
    out = linear_pallas(out.reshape(B * S, dim), w_proj_t, params["b_proj"],
                        out_dtype=x.dtype)
    return out.reshape(B, H, W, dim)


def reference_forward(x, params, num_heads):
    """Pure-JAX f32 reference mirroring the PyTorch forward exactly."""
    B, H, W, dim = x.shape
    head_dim = dim // num_heads
    scale = head_dim ** (-0.5)
    S = H * W
    qkv = x.reshape(B * S, dim) @ params["w_qkv"].T + params["b_qkv"]
    qkv = qkv.reshape(B, S, 3, num_heads, head_dim)
    qkv = jnp.transpose(qkv, (2, 0, 3, 1, 4)).reshape(3, B * num_heads, S, head_dim)
    q, k, v = qkv[0], qkv[1], qkv[2]
    attn = (q * scale) @ jnp.swapaxes(k, -2, -1)
    Rh = get_rel_pos_jax(H, H, params["rel_pos_h"])
    Rw = get_rel_pos_jax(W, W, params["rel_pos_w"])
    r_q = q.reshape(B * num_heads, H, W, head_dim)
    rel_h = jnp.einsum("bhwc,hkc->bhwk", r_q, Rh)
    rel_w = jnp.einsum("bhwc,wkc->bhwk", r_q, Rw)
    attn = (attn.reshape(B * num_heads, H, W, H, W)
            + rel_h[:, :, :, :, None]
            + rel_w[:, :, :, None, :]).reshape(B * num_heads, S, S)
    attn = jax.nn.softmax(attn, axis=-1)
    out = (attn @ v).reshape(B, num_heads, H, W, head_dim)
    out = jnp.transpose(out, (0, 2, 3, 1, 4)).reshape(B * S, dim)
    out = out @ params["w_proj"].T + params["b_proj"]
    return out.reshape(B, H, W, dim)


# ----------------------------------------------------------------------------
# main
# ----------------------------------------------------------------------------
if __name__ == "__main__":
    B, H, W = 2, 8, 8
    dim, num_heads = 32, 4
    head_dim = dim // num_heads

    key = jax.random.PRNGKey(0)
    kx, k1, k2, k3, k4, k5, k6 = jax.random.split(key, 7)

    x = jax.random.normal(kx, (B, H, W, dim), dtype=jnp.float32)
    params = {
        # nn.Linear(dim, 3*dim, bias=True): weight (3*dim, dim), bias (3*dim,)
        "w_qkv": jax.random.normal(k1, (3 * dim, dim), dtype=jnp.float32) * 0.05,
        "b_qkv": jax.random.normal(k2, (3 * dim,), dtype=jnp.float32) * 0.05,
        # nn.Linear(dim, dim)
        "w_proj": jax.random.normal(k3, (dim, dim), dtype=jnp.float32) * 0.05,
        "b_proj": jax.random.normal(k4, (dim,), dtype=jnp.float32) * 0.05,
        # rel_pos_h / rel_pos_w: (2*input_size-1, head_dim)
        "rel_pos_h": jax.random.normal(k5, (2 * H - 1, head_dim), dtype=jnp.float32) * 0.1,
        "rel_pos_w": jax.random.normal(k6, (2 * W - 1, head_dim), dtype=jnp.float32) * 0.1,
    }

    # max_q_rows=32 -> 2 q-row tiles at this toy size (exercises the tiled path)
    out = attention_forward(x, params, num_heads, max_q_rows=32)
    out = jax.block_until_ready(out)

    ref = reference_forward(x, params, num_heads)
    assert out.shape == (B, H, W, dim)
    # bf16 MXU operands + bf16 inter-kernel intermediates (f32 accumulation)
    assert jnp.allclose(out, ref, atol=2e-2, rtol=2e-2), (
        float(jnp.max(jnp.abs(out - ref))))

    print("KERNEL_OK")
</pallas_src>

<mosaic_0001>
module attributes {stable_mosaic.version = 11 : i64} {
  func.func @_linear_kernel(%arg0: i32, %arg1: i32, %arg2: i32, %arg3: memref<128x32xf32, #tpu.memory_space<vmem>>, %arg4: memref<32x96xbf16, #tpu.memory_space<vmem>>, %arg5: memref<1x96xf32, #tpu.memory_space<vmem>>, %arg6: memref<128x96xbf16, #tpu.memory_space<vmem>>, %arg7: memref<128x96xf32, #tpu.memory_space<vmem>>) attributes {dimension_semantics = [#tpu.dimension_semantics<parallel>, #tpu.dimension_semantics<parallel>, #tpu.dimension_semantics<arbitrary>], iteration_bounds = array<i64: 1, 1, 1>, scalar_prefetch = 0 : i64, scratch_operands = 1 : i64, tpu.core_type = #tpu.core_type<tc>, window_params = [{transform_indices = @transform_0, window_bounds = array<i64: 128, 32>}, {transform_indices = @transform_1, window_bounds = array<i64: 32, 96>}, {transform_indices = @transform_2, window_bounds = array<i64: 1, 96>}, {transform_indices = @transform_3, window_bounds = array<i64: 128, 96>}]} {
    %c0_i32 = arith.constant 0 : i32
    %0 = arith.cmpi eq, %arg2, %c0_i32 : i32
    %1 = arith.extui %0 : i1 to i32
    %c0_i32_0 = arith.constant 0 : i32
    %2 = arith.cmpi ne, %1, %c0_i32_0 : i32
    scf.if %2 {
      %cst_10 = arith.constant 0.000000e+00 : f32
      %13 = vector.broadcast %cst_10 : f32 to vector<128x96xf32>
      %c0_11 = arith.constant 0 : index
      %c0_12 = arith.constant 0 : index
      %14 = vector.load %arg7[%c0_11, %c0_12] : memref<128x96xf32, #tpu.memory_space<vmem>>, vector<128x96xf32>
      tpu.vector_store %arg7[%c0_11, %c0_12], %13 {strides = array<i32>} : memref<128x96xf32, #tpu.memory_space<vmem>>, vector<128x96xf32>,
    } else {
    }
    %c0 = arith.constant 0 : index
    %c0_1 = arith.constant 0 : index
    %3 = vector.load %arg7[%c0, %c0_1] : memref<128x96xf32, #tpu.memory_space<vmem>>, vector<128x96xf32>
    %c0_2 = arith.constant 0 : index
    %c0_3 = arith.constant 0 : index
    %4 = vector.load %arg3[%c0_2, %c0_3] : memref<128x32xf32, #tpu.memory_space<vmem>>, vector<128x32xf32>
    %5 = arith.truncf %4 : vector<128x32xf32> to vector<128x32xbf16>
    %c0_4 = arith.constant 0 : index
    %c0_5 = arith.constant 0 : index
    %6 = vector.load %arg4[%c0_4, %c0_5] : memref<32x96xbf16, #tpu.memory_space<vmem>>, vector<32x96xbf16>
    %cst = arith.constant dense<0.000000e+00> : vector<128x96xf32>
    %7 = tpu.matmul %5, %6, %cst {dimension_numbers = #tpu.dot_dimension_numbers<[1], [0], [0], [1], [0, 0, 1, 1], [], []>} : vector<128x32xbf16>, vector<32x96xbf16>, vector<128x96xf32> -> vector<128x96xf32>
    %8 = arith.addf %3, %7 : vector<128x96xf32>
    %c0_6 = arith.constant 0 : index
    %c0_7 = arith.constant 0 : index
    %9 = vector.load %arg7[%c0_6, %c0_7] : memref<128x96xf32, #tpu.memory_space<vmem>>, vector<128x96xf32>
    tpu.vector_store %arg7[%c0_6, %c0_7], %8 {strides = array<i32>} : memref<128x96xf32, #tpu.memory_space<vmem>>, vector<128x96xf32>,
    %c0_i32_8 = arith.constant 0 : i32
    %10 = arith.cmpi eq, %arg2, %c0_i32_8 : i32
    %11 = arith.extui %10 : i1 to i32
    %c0_i32_9 = arith.constant 0 : i32
    %12 = arith.cmpi ne, %11, %c0_i32_9 : i32
    scf.if %12 {
      %c0_10 = arith.constant 0 : index
      %c0_11 = arith.constant 0 : index
      %13 = vector.load %arg7[%c0_10, %c0_11] : memref<128x96xf32, #tpu.memory_space<vmem>>, vector<128x96xf32>
      %c0_12 = arith.constant 0 : index
      %c0_13 = arith.constant 0 : index
      %14 = vector.load %arg5[%c0_12, %c0_13] : memref<1x96xf32, #tpu.memory_space<vmem>>, vector<1x96xf32>
      %15 = vector.broadcast %14 : vector<1x96xf32> to vector<128x96xf32>
      %16 = arith.addf %13, %15 : vector<128x96xf32>
      %17 = arith.truncf %16 : vector<128x96xf32> to vector<128x96xbf16>
      %c0_14 = arith.constant 0 : index
      %c0_15 = arith.constant 0 : index
      %18 = vector.load %arg6[%c0_14, %c0_15] : memref<128x96xbf16, #tpu.memory_space<vmem>>, vector<128x96xbf16>
      tpu.vector_store %arg6[%c0_14, %c0_15], %17 {strides = array<i32>} : memref<128x96xbf16, #tpu.memory_space<vmem>>, vector<128x96xbf16>,
    } else {
    }
    return
  }
  func.func @transform_0(%arg0: i32, %arg1: i32, %arg2: i32) -> (i32, i32) {
    %c0_i32 = arith.constant 0 : i32
    return %arg0, %arg2 : i32, i32
  }
  func.func @transform_1(%arg0: i32, %arg1: i32, %arg2: i32) -> (i32, i32) {
    %c0_i32 = arith.constant 0 : i32
    return %arg2, %arg1 : i32, i32
  }
  func.func @transform_2(%arg0: i32, %arg1: i32, %arg2: i32) -> (i32, i32) {
    %c0_i32 = arith.constant 0 : i32
    %c0_i32_0 = arith.constant 0 : i32
    return %c0_i32, %arg1 : i32, i32
  }
  func.func @transform_3(%arg0: i32, %arg1: i32, %arg2: i32) -> (i32, i32) {
    %c0_i32 = arith.constant 0 : i32
    return %arg0, %arg1 : i32, i32
  }
}

</mosaic_0001>

<llo_original>
// kernel: tpu_custom_call.1
$region0: #{tpu_custom_call.1}
  #allocation0 [shape = 'u32[]', space=smem, size = 0x4, offset = 0x4, fixed_abs, tag = 'smem constant byte address 0x4 - core index']
  #allocation1 [shape = 'u32[144,128]{1,0:T(1,128)}', space=vmem, size = 0x12000, scoped, tag = 'internal scratch']
  #allocation2 [shape = 'f32[128,96]{1,0:T(8,128)}', space=vmem, size = 0x10000, scoped, tag = 'scratch operand']
  %s0 = inlined_call_operand.hbm [shape: f32[128,32], index: 0, kind: input, shape index: {}]
  %s1 = inlined_call_operand.hbm [shape: bf16[32,96], index: 1, kind: input, shape index: {}]
  %s2 = inlined_call_operand.hbm [shape: f32[1,96], index: 2, kind: input, shape index: {}]
  %s3 = inlined_call_operand.hbm [shape: bf16[128,96], index: 3, kind: output, shape index: {}]
  %s4 = sld [smem:[#allocation0]]
  $region42: #{tpu_custom_call.1} parent=0
    _
  %s6 = ssub.s32 1, %s4
  %s7 = scalar_select 0, %s6, %s4
  $region1: #{tpu_custom_call.1} parent=0
    #allocation3 [shape = 'u8[65536]{0}', space=vmem, size = 0x10000, scoped, tag = 'input window, operand 0, single buffered']
    #allocation4 [shape = 's32[1]{0}', space=sflag, size = 0x4, scoped, tag = 'scoped memory for tpu_custom_call.1']
    #allocation5 [shape = 's32[1]{0}', space=sflag, size = 0x4, scoped, tag = 'scoped memory for tpu_custom_call.1']
    #allocation6 [shape = 'u8[8192]{0}', space=vmem, size = 0x2000, scoped, tag = 'input window, operand 1, single buffered']
    #allocation7 [shape = 's32[1]{0}', space=sflag, size = 0x4, scoped, tag = 'scoped memory for tpu_custom_call.1']
    #allocation8 [shape = 'u8[512]{0}', space=vmem, size = 0x400, scoped, tag = 'input window, operand 2, single buffered']
    #allocation9 [shape = 'u8[32768]{0}', space=vmem, size = 0x8000, scoped, tag = 'output window, operand 0, single buffered']
    %8 = vsyncpa [#allocation4], 0
    %9 = vsyncpa [#allocation7], 0
    %10 = vsyncpa [#allocation5], 0
    // Predicated region
    $region2: #{tpu_custom_call.1} parent=1 // pred_check
      _
    $region3: #{tpu_custom_call.1} parent=1 // pred_check_branch
      %12 = sbr.rel (0) target = $region5
    $region4: #{tpu_custom_call.1} parent=1 // pred_region
      %s14 = ssub.s32 2048, 2048
      %15 = vsyncadd [#allocation4], %s14
      %s16 = sshll.u32 [#allocation3], 4
      %s17 = int_to_ptr.vmem [resolvable:$true] %s16
      %22 = dma.hbm_to_vmem [thread:$0]  %s0, 2048, %s17, [#allocation4], 128, 128, 8
    $region5: #{tpu_custom_call.1} parent=1 // pred_fallthru
      _
    // Predicated region
    $region6: #{tpu_custom_call.1} parent=1 // pred_check
      _
    $region7: #{tpu_custom_call.1} parent=1 // pred_check_branch
      %24 = sbr.rel (0) target = $region9
    $region8: #{tpu_custom_call.1} parent=1 // pred_region
      %s26 = ssub.s32 256, 256
      %27 = vsyncadd [#allocation7], %s26
      %s28 = sshll.u32 [#allocation6], 4
      %s29 = int_to_ptr.vmem [resolvable:$true] %s28
      %34 = dma.hbm_to_vmem [thread:$0]  %s1, 256, %s29, [#allocation7], 64, 64, 4
    $region9: #{tpu_custom_call.1} parent=1 // pred_fallthru
      _
    // Predicated region
    $region10: #{tpu_custom_call.1} parent=1 // pred_check
      _
    $region11: #{tpu_custom_call.1} parent=1 // pred_check_branch
      %36 = sbr.rel (0) target = $region13
    $region12: #{tpu_custom_call.1} parent=1 // pred_region
      %s38 = ssub.s32 16, 16
      %39 = vsyncadd [#allocation7], %s38
      %s41 = sshll.u32 [#allocation8], 4
      %s42 = int_to_ptr.vmem [resolvable:$true] %s41
      %44 = dma.hbm_to_vmem [thread:$0]  %s2, 16, %s42, [#allocation7]
    $region13: #{tpu_custom_call.1} parent=1 // pred_fallthru
      _
    // Predicated region
    $region14: #{tpu_custom_call.1} parent=1 // pred_check
      _
    $region15: #{tpu_custom_call.1} parent=1 // pred_check_branch
      %46 = sbr.rel (0) target = $region17
    $region16: #{tpu_custom_call.1} parent=1 // pred_region
      %47 = dma.done [#allocation4], 2048
    $region17: #{tpu_custom_call.1} parent=1 // pred_fallthru
      _
    // Predicated region
    $region18: #{tpu_custom_call.1} parent=1 // pred_check
      _
    $region19: #{tpu_custom_call.1} parent=1 // pred_check_branch
      %49 = sbr.rel (0) target = $region21
    $region20: #{tpu_custom_call.1} parent=1 // pred_region
      %50 = dma.done [#allocation7], 256
    $region21: #{tpu_custom_call.1} parent=1 // pred_fallthru
      _
    // Predicated region
    $region22: #{tpu_custom_call.1} parent=1 // pred_check
      _
    $region23: #{tpu_custom_call.1} parent=1 // pred_check_branch
      %52 = sbr.rel (0) target = $region25
    $region24: #{tpu_custom_call.1} parent=1 // pred_region
      %53 = dma.done [#allocation7], 16
    $region25: #{tpu_custom_call.1} parent=1 // pred_fallthru
      _
    %p55 = scmp.eq.s32.totalorder 0, 0
    // Predicated region
    $region26: #{tpu_custom_call.1} parent=1 // pred_check
      %p56 = pneg %p55
    $region27: #{tpu_custom_call.1} parent=1 // pred_check_branch
      %58 = sbr.rel (%p56) target = $region29
    $region28: #{tpu_custom_call.1} parent=1 // pred_region
      %vm59 = vcmask 785408
      %60 = vst.msk [vmem:[#allocation2] sm:$0xff] %vm59, 0.0
      %61 = vst.msk [vmem:[#allocation2 + $0x8] sm:$0xff] %vm59, 0.0
      %62 = vst.msk [vmem:[#allocation2 + $0x10] sm:$0xff] %vm59, 0.0
      %63 = vst.msk [vmem:[#allocation2 + $0x18] sm:$0xff] %vm59, 0.0
      %64 = vst.msk [vmem:[#allocation2 + $0x20] sm:$0xff] %vm59, 0.0
      %65 = vst.msk [vmem:[#allocation2 + $0x28] sm:$0xff] %vm59, 0.0
      %66 = vst.msk [vmem:[#allocation2 + $0x30] sm:$0xff] %vm59, 0.0
      %67 = vst.msk [vmem:[#allocation2 + $0x38] sm:$0xff] %vm59, 0.0
      %68 = vst.msk [vmem:[#allocation2 + $0x40] sm:$0xff] %vm59, 0.0
      %69 = vst.msk [vmem:[#allocation2 + $0x48] sm:$0xff] %vm59, 0.0
      %70 = vst.msk [vmem:[#allocation2 + $0x50] sm:$0xff] %vm59, 0.0
      %71 = vst.msk [vmem:[#allocation2 + $0x58] sm:$0xff] %vm59, 0.0
      %72 = vst.msk [vmem:[#allocation2 + $0x60] sm:$0xff] %vm59, 0.0
      %73 = vst.msk [vmem:[#allocation2 + $0x68] sm:$0xff] %vm59, 0.0
      %74 = vst.msk [vmem:[#allocation2 + $0x70] sm:$0xff] %vm59, 0.0
      %75 = vst.msk [vmem:[#allocation2 + $0x78] sm:$0xff] %vm59, 0.0
    $region29: #{tpu_custom_call.1} parent=1 // pred_fallthru
      _
    %v76 = vld [vmem:[#allocation2] sm:$0xff]
    %v77 = vld [vmem:[#allocation2 + $0x8] sm:$0xff]
    %v78 = vld [vmem:[#allocation2 + $0x10] sm:$0xff]
    %v79 = vld [vmem:[#allocation2 + $0x18] sm:$0xff]
    %v80 = vld [vmem:[#allocation2 + $0x20] sm:$0xff]
    %v81 = vld [vmem:[#allocation2 + $0x28] sm:$0xff]
    %v82 = vld [vmem:[#allocation2 + $0x30] sm:$0xff]
    %v83 = vld [vmem:[#allocation2 + $0x38] sm:$0xff]
    %v84 = vld [vmem:[#allocation2 + $0x40] sm:$0xff]
    %v85 = vld [vmem:[#allocation2 + $0x48] sm:$0xff]
    %v86 = vld [vmem:[#allocation2 + $0x50] sm:$0xff]
    %v87 = vld [vmem:[#allocation2 + $0x58] sm:$0xff]
    %v88 = vld [vmem:[#allocation2 + $0x60] sm:$0xff]
    %v89 = vld [vmem:[#allocation2 + $0x68] sm:$0xff]
    %v90 = vld [vmem:[#allocation2 + $0x70] sm:$0xff]
    %v91 = vld [vmem:[#allocation2 + $0x78] sm:$0xff]
    %v92 = vld [vmem:[#allocation3] sm:$0xff]
    %v93 = vld [vmem:[#allocation3 + $0x8] sm:$0xff]
    %v94 = vld [vmem:[#allocation3 + $0x10] sm:$0xff]
    %v95 = vld [vmem:[#allocation3 + $0x18] sm:$0xff]
    %v96 = vld [vmem:[#allocation3 + $0x20] sm:$0xff]
    %v97 = vld [vmem:[#allocation3 + $0x28] sm:$0xff]
    %v98 = vld [vmem:[#allocation3 + $0x30] sm:$0xff]
    %v99 = vld [vmem:[#allocation3 + $0x38] sm:$0xff]
    %v100 = vld [vmem:[#allocation3 + $0x40] sm:$0xff]
    %v101 = vld [vmem:[#allocation3 + $0x48] sm:$0xff]
    %v102 = vld [vmem:[#allocation3 + $0x50] sm:$0xff]
    %v103 = vld [vmem:[#allocation3 + $0x58] sm:$0xff]
    %v104 = vld [vmem:[#allocation3 + $0x60] sm:$0xff]
    %v105 = vld [vmem:[#allocation3 + $0x68] sm:$0xff]
    %v106 = vld [vmem:[#allocation3 + $0x70] sm:$0xff]
    %v107 = vld [vmem:[#allocation3 + $0x78] sm:$0xff]
    %v108 = vpack.c.bf16 %v93, %v92
    %v109 = vpack.c.bf16 %v95, %v94
    %v110 = vpack.c.bf16 %v97, %v96
    %v111 = vpack.c.bf16 %v99, %v98
    %v112 = vpack.c.bf16 %v101, %v100
    %v113 = vpack.c.bf16 %v103, %v102
    %v114 = vpack.c.bf16 %v105, %v104
    %v115 = vpack.c.bf16 %v107, %v106
    %v116 = vld [vmem:[#allocation6] sm:$0xf]
    %v117 = vld [vmem:[#allocation6 + $0x4] sm:$0xf]
    %v118 = vld [vmem:[#allocation6 + $0x8] sm:$0xf]
    %v119 = vld [vmem:[#allocation6 + $0xc] sm:$0xf]
    %v124 = vunpack.c.l.b16 %v116
    %v125 = vunpack.c.l.b16 %v117
    %v126 = vunpack.c.l.b16 %v118
    %v127 = vunpack.c.l.b16 %v119
    %v128 = vpack.c.b16 %v125, %v124
    %v129 = vpack.c.b16 %v127, %v126
    %vm132 = vcmask 261120
    %v134 = vsel %vm132, %v108, 0
    %v137 = vsel %vm132, %v109, 0
    %v140 = vsel %vm132, %v110, 0
    %v143 = vsel %vm132, %v111, 0
    %v146 = vsel %vm132, %v112, 0
    %v149 = vsel %vm132, %v113, 0
    %v152 = vsel %vm132, %v114, 0
    %v155 = vsel %vm132, %v115, 0
    %157 = vmatprep.subr.bf16.mxu0 0
    %158 = vmatpush1.bf16.msra.mxu0 %v128
    %159 = vmatprep.subr.bf16.mxu0 0
    %160 = vmatpush1.bf16.msra.mxu0 %v129
    %161 = vmatprep.subr.bf16.mxu0 0
    %162 = vmatpush1.bf16.msra.mxu0 0
    %163 = vmatprep.subr.bf16.mxu0 0
    %164 = vmatpush1.bf16.msra.mxu0 0
    %165 = vmatprep.subr.bf16.mxu0 0
    %166 = vmatpush1.bf16.msra.mxu0 0
    %167 = vmatprep.subr.bf16.mxu0 0
    %168 = vmatpush1.bf16.msra.mxu0 0
    %169 = vmatprep.subr.bf16.mxu0 0
    %170 = vmatpush1.bf16.msra.mxu0 0
    %171 = vmatprep.subr.bf16.mxu0 0
    %172 = vmatpush1.bf16.msra.mxu0 0
    %173 = vmatprep.subr.bf16.mxu0 0
    %174 = vmatpush1.bf16.msra.mxu0 0
    %175 = vmatprep.subr.bf16.mxu0 0
    %176 = vmatpush1.bf16.msra.mxu0 0
    %177 = vmatprep.subr.bf16.mxu0 0
    %178 = vmatpush1.bf16.msra.mxu0 0
    %179 = vmatprep.subr.bf16.mxu0 0
    %180 = vmatpush1.bf16.msra.mxu0 0
    %181 = vmatprep.subr.bf16.mxu0 0
    %182 = vmatpush1.bf16.msra.mxu0 0
    %183 = vmatprep.subr.bf16.mxu0 0
    %184 = vmatpush1.bf16.msra.mxu0 0
    %185 = vmatprep.subr.bf16.mxu0 0
    %186 = vmatpush1.bf16.msra.mxu0 0
    %187 = vmatprep.subr.bf16.mxu0 0
    %188 = vmatpush1.bf16.msra.mxu0 0
    %189 = vmatprep.mubr.bf16.mxu0 0
    %190 = vmatmul.mubr.bf16.gmra.mrb[0].mxu0 %v134
    %v191 = vpop.f32.mrb[0].mxu0
    %v192 = vadd.f32 0.0, %v191
    %v193 = vpop.f32.mrb[0].mxu0
    %v194 = vpop.f32.mrb[0].mxu0
    %v195 = vadd.f32 0.0, %v194
    %v196 = vpop.f32.mrb[0].mxu0
    %197 = vmatprep.mubr.bf16.mxu0 0
    %198 = vmatmul.mubr.bf16.gmra.mrb[0].mxu0 %v137
    %v199 = vpop.f32.mrb[0].mxu0
    %v200 = vadd.f32 0.0, %v199
    %v201 = vpop.f32.mrb[0].mxu0
    %v202 = vpop.f32.mrb[0].mxu0
    %v203 = vadd.f32 0.0, %v202
    %v204 = vpop.f32.mrb[0].mxu0
    %205 = vmatprep.mubr.bf16.mxu0 0
    %206 = vmatmul.mubr.bf16.gmra.mrb[0].mxu0 %v140
    %v207 = vpop.f32.mrb[0].mxu0
    %v208 = vadd.f32 0.0, %v207
    %v209 = vpop.f32.mrb[0].mxu0
    %v210 = vpop.f32.mrb[0].mxu0
    %v211 = vadd.f32 0.0, %v210
    %v212 = vpop.f32.mrb[0].mxu0
    %213 = vmatprep.mubr.bf16.mxu0 0
    %214 = vmatmul.mubr.bf16.gmra.mrb[0].mxu0 %v143
    %v215 = vpop.f32.mrb[0].mxu0
    %v216 = vadd.f32 0.0, %v215
    %v217 = vpop.f32.mrb[0].mxu0
    %v218 = vpop.f32.mrb[0].mxu0
    %v219 = vadd.f32 0.0, %v218
    %v220 = vpop.f32.mrb[0].mxu0
    %221 = vmatprep.mubr.bf16.mxu0 0
    %222 = vmatmul.mubr.bf16.gmra.mrb[0].mxu0 %v146
    %v223 = vpop.f32.mrb[0].mxu0
    %v224 = vadd.f32 0.0, %v223
    %v225 = vpop.f32.mrb[0].mxu0
    %v226 = vpop.f32.mrb[0].mxu0
    %v227 = vadd.f32 0.0, %v226
    %v228 = vpop.f32.mrb[0].mxu0
    %229 = vmatprep.mubr.bf16.mxu0 0
    %230 = vmatmul.mubr.bf16.gmra.mrb[0].mxu0 %v149
    %v231 = vpop.f32.mrb[0].mxu0
    %v232 = vadd.f32 0.0, %v231
    %v233 = vpop.f32.mrb[0].mxu0
    %v234 = vpop.f32.mrb[0].mxu0
    %v235 = vadd.f32 0.0, %v234
    %v236 = vpop.f32.mrb[0].mxu0
    %237 = vmatprep.mubr.bf16.mxu0 0
    %238 = vmatmul.mubr.bf16.gmra.mrb[0].mxu0 %v152
    %v239 = vpop.f32.mrb[0].mxu0
    %v240 = vadd.f32 0.0, %v239
    %v241 = vpop.f32.mrb[0].mxu0
    %v242 = vpop.f32.mrb[0].mxu0
    %v243 = vadd.f32 0.0, %v242
    %v244 = vpop.f32.mrb[0].mxu0
    %245 = vmatprep.mubr.bf16.mxu0 0
    %246 = vmatmul.mubr.bf16.gmra.mrb[0].mxu0 %v155
    %v247 = vpop.f32.mrb[0].mxu0
    %v248 = vadd.f32 0.0, %v247
    %v249 = vpop.f32.mrb[0].mxu0
    %v250 = vpop.f32.mrb[0].mxu0
    %v251 = vadd.f32 0.0, %v250
    %v252 = vpop.f32.mrb[0].mxu0
    %253 = vdwg.mxu0
    %v254 = vadd.f32 %v76, %v192
    %v255 = vadd.f32 %v77, %v195
    %v256 = vadd.f32 %v78, %v200
    %v257 = vadd.f32 %v79, %v203
    %v258 = vadd.f32 %v80, %v208
    %v259 = vadd.f32 %v81, %v211
    %v260 = vadd.f32 %v82, %v216
    %v261 = vadd.f32 %v83, %v219
    %v262 = vadd.f32 %v84, %v224
    %v263 = vadd.f32 %v85, %v227
    %v264 = vadd.f32 %v86, %v232
    %v265 = vadd.f32 %v87, %v235
    %v266 = vadd.f32 %v88, %v240
    %v267 = vadd.f32 %v89, %v243
    %v268 = vadd.f32 %v90, %v248
    %v269 = vadd.f32 %v91, %v251
    %vm270 = vcmask 785408
    %271 = vst.msk [vmem:[#allocation2] sm:$0xff] %vm270, %v254
    %272 = vst.msk [vmem:[#allocation2 + $0x8] sm:$0xff] %vm270, %v255
    %273 = vst.msk [vmem:[#allocation2 + $0x10] sm:$0xff] %vm270, %v256
    %274 = vst.msk [vmem:[#allocation2 + $0x18] sm:$0xff] %vm270, %v257
    %275 = vst.msk [vmem:[#allocation2 + $0x20] sm:$0xff] %vm270, %v258
    %276 = vst.msk [vmem:[#allocation2 + $0x28] sm:$0xff] %vm270, %v259
    %277 = vst.msk [vmem:[#allocation2 + $0x30] sm:$0xff] %vm270, %v260
    %278 = vst.msk [vmem:[#allocation2 + $0x38] sm:$0xff] %vm270, %v261
    %279 = vst.msk [vmem:[#allocation2 + $0x40] sm:$0xff] %vm270, %v262
    %280 = vst.msk [vmem:[#allocation2 + $0x48] sm:$0xff] %vm270, %v263
    %281 = vst.msk [vmem:[#allocation2 + $0x50] sm:$0xff] %vm270, %v264
    %282 = vst.msk [vmem:[#allocation2 + $0x58] sm:$0xff] %vm270, %v265
    %283 = vst.msk [vmem:[#allocation2 + $0x60] sm:$0xff] %vm270, %v266
    %284 = vst.msk [vmem:[#allocation2 + $0x68] sm:$0xff] %vm270, %v267
    %285 = vst.msk [vmem:[#allocation2 + $0x70] sm:$0xff] %vm270, %v268
    %286 = vst.msk [vmem:[#allocation2 + $0x78] sm:$0xff] %vm270, %v269
    // Predicated region
    $region30: #{tpu_custom_call.1} parent=1 // pred_check
      %p287 = pneg %p55
    $region31: #{tpu_custom_call.1} parent=1 // pred_check_branch
      %289 = sbr.rel (%p287) target = $region33
    $region32: #{tpu_custom_call.1} parent=1 // pred_region
      %v290 = vld [vmem:[#allocation2] sm:$0xff]
      %v291 = vld [vmem:[#allocation2 + $0x8] sm:$0xff]
      %v292 = vld [vmem:[#allocation2 + $0x10] sm:$0xff]
      %v293 = vld [vmem:[#allocation2 + $0x18] sm:$0xff]
      %v294 = vld [vmem:[#allocation2 + $0x20] sm:$0xff]
      %v295 = vld [vmem:[#allocation2 + $0x28] sm:$0xff]
      %v296 = vld [vmem:[#allocation2 + $0x30] sm:$0xff]
      %v297 = vld [vmem:[#allocation2 + $0x38] sm:$0xff]
      %v298 = vld [vmem:[#allocation2 + $0x40] sm:$0xff]
      %v299 = vld [vmem:[#allocation2 + $0x48] sm:$0xff]
      %v300 = vld [vmem:[#allocation2 + $0x50] sm:$0xff]
      %v301 = vld [vmem:[#allocation2 + $0x58] sm:$0xff]
      %v302 = vld [vmem:[#allocation2 + $0x60] sm:$0xff]
      %v303 = vld [vmem:[#allocation2 + $0x68] sm:$0xff]
      %v304 = vld [vmem:[#allocation2 + $0x70] sm:$0xff]
      %v305 = vld [vmem:[#allocation2 + $0x78] sm:$0xff]
      %v306 = vld [vmem:[#allocation8] sm:$0x1]
      %v308 = vlaneseq
      %v309 = vshrl.u32 %v308, 7
      %v310 = vsub.s32 0, %v309
      %v311 = vrot.slane %v306, %v310
      %v313 = vadd.f32 %v290, %v311
      %v314 = vadd.f32 %v291, %v311
      %v315 = vadd.f32 %v292, %v311
      %v316 = vadd.f32 %v293, %v311
      %v317 = vadd.f32 %v294, %v311
      %v318 = vadd.f32 %v295, %v311
      %v319 = vadd.f32 %v296, %v311
      %v320 = vadd.f32 %v297, %v311
      %v321 = vadd.f32 %v298, %v311
      %v322 = vadd.f32 %v299, %v311
      %v323 = vadd.f32 %v300, %v311
      %v324 = vadd.f32 %v301, %v311
      %v325 = vadd.f32 %v302, %v311
      %v326 = vadd.f32 %v303, %v311
      %v327 = vadd.f32 %v304, %v311
      %v328 = vadd.f32 %v305, %v311
      %v329 = vpack.c.bf16 %v314, %v313
      %v330 = vpack.c.bf16 %v316, %v315
      %v331 = vpack.c.bf16 %v318, %v317
      %v332 = vpack.c.bf16 %v320, %v319
      %v333 = vpack.c.bf16 %v322, %v321
      %v334 = vpack.c.bf16 %v324, %v323
      %v335 = vpack.c.bf16 %v326, %v325
      %v336 = vpack.c.bf16 %v328, %v327
      %v345 = vunpack.c.l.b16 %v329
      %v346 = vunpack.c.h.b16 %v329
      %v347 = vunpack.c.l.b16 %v330
      %v348 = vunpack.c.h.b16 %v330
      %v349 = vunpack.c.l.b16 %v331
      %v350 = vunpack.c.h.b16 %v331
      %v351 = vunpack.c.l.b16 %v332
      %v352 = vunpack.c.h.b16 %v332
      %v353 = vunpack.c.l.b16 %v333
      %v354 = vunpack.c.h.b16 %v333
      %v355 = vunpack.c.l.b16 %v334
      %v356 = vunpack.c.h.b16 %v334
      %v357 = vunpack.c.l.b16 %v335
      %v358 = vunpack.c.h.b16 %v335
      %v359 = vunpack.c.l.b16 %v336
      %v360 = vunpack.c.h.b16 %v336
      %v361 = vpack.c.b16 %v345, %v345
      %v362 = vpack.c.b16 %v346, %v346
      %v363 = vpack.c.b16 %v347, %v347
      %v364 = vpack.c.b16 %v348, %v348
      %v365 = vpack.c.b16 %v349, %v349
      %v366 = vpack.c.b16 %v350, %v350
      %v367 = vpack.c.b16 %v351, %v351
      %v368 = vpack.c.b16 %v352, %v352
      %v369 = vpack.c.b16 %v353, %v353
      %v370 = vpack.c.b16 %v354, %v354
      %v371 = vpack.c.b16 %v355, %v355
      %v372 = vpack.c.b16 %v356, %v356
      %v373 = vpack.c.b16 %v357, %v357
      %v374 = vpack.c.b16 %v358, %v358
      %v375 = vpack.c.b16 %v359, %v359
      %v376 = vpack.c.b16 %v360, %v360
      %vm393 = vcmask 781312
      %394 = vst.msk [vmem:[#allocation9] sm:$0xf] %vm393, %v361
      %395 = vst.msk [vmem:[#allocation9 + $0x4] sm:$0xf] %vm393, %v362
      %396 = vst.msk [vmem:[#allocation9 + $0x8] sm:$0xf] %vm393, %v363
      %397 = vst.msk [vmem:[#allocation9 + $0xc] sm:$0xf] %vm393, %v364
      %398 = vst.msk [vmem:[#allocation9 + $0x10] sm:$0xf] %vm393, %v365
      %399 = vst.msk [vmem:[#allocation9 + $0x14] sm:$0xf] %vm393, %v366
      %400 = vst.msk [vmem:[#allocation9 + $0x18] sm:$0xf] %vm393, %v367
      %401 = vst.msk [vmem:[#allocation9 + $0x1c] sm:$0xf] %vm393, %v368
      %402 = vst.msk [vmem:[#allocation9 + $0x20] sm:$0xf] %vm393, %v369
      %403 = vst.msk [vmem:[#allocation9 + $0x24] sm:$0xf] %vm393, %v370
      %404 = vst.msk [vmem:[#allocation9 + $0x28] sm:$0xf] %vm393, %v371
      %405 = vst.msk [vmem:[#allocation9 + $0x2c] sm:$0xf] %vm393, %v372
      %406 = vst.msk [vmem:[#allocation9 + $0x30] sm:$0xf] %vm393, %v373
      %407 = vst.msk [vmem:[#allocation9 + $0x34] sm:$0xf] %vm393, %v374
      %408 = vst.msk [vmem:[#allocation9 + $0x38] sm:$0xf] %vm393, %v375
      %409 = vst.msk [vmem:[#allocation9 + $0x3c] sm:$0xf] %vm393, %v376
    $region33: #{tpu_custom_call.1} parent=1 // pred_fallthru
      _
    // Predicated region
    $region34: #{tpu_custom_call.1} parent=1 // pred_check
      _
    $region35: #{tpu_custom_call.1} parent=1 // pred_check_branch
      %411 = sbr.rel (0) target = $region37
    $region36: #{tpu_custom_call.1} parent=1 // pred_region
      %s413 = ssub.s32 1024, 1024
      %414 = vsyncadd [#allocation5], %s413
      %s415 = sshll.u32 [#allocation9], 4
      %s416 = int_to_ptr.vmem [resolvable:$true] %s415
      %421 = dma.vmem_to_hbm [thread:$0]  %s416, 1024, %s3, [#allocation5], 64, 64, 4
    $region37: #{tpu_custom_call.1} parent=1 // pred_fallthru
      _
    // Predicated region
    $region38: #{tpu_custom_call.1} parent=1 // pred_check
      _
    $region39: #{tpu_custom_call.1} parent=1 // pred_check_branch
      %423 = sbr.rel (0) target = $region41
    $region40: #{tpu_custom_call.1} parent=1 // pred_region
      %424 = dma.done [#allocation5], 1024
    $region41: #{tpu_custom_call.1} parent=1 // pred_fallthru
      _
    %425 = vsyncpa [#allocation4], 1
    %426 = vsyncpa [#allocation7], 1
    %427 = vsyncpa [#allocation5], 1

</llo_original>
